<compile_context>
chip_gen: v6e
topology: v6e:2x2x1
jax: 0.10.0
libtpu: 0.0.40
codegen_flags: <defaults>
</compile_context>

<pallas_src>
import functools

import jax
import jax.numpy as jnp
from jax.experimental import pallas as pl
from jax.experimental.pallas import tpu as pltpu

K = 3                                 # MaxPool2d(kernel_size=3): kernel = stride = 3
_VMEM_BUDGET = 12 * 1024 * 1024       # bytes for double-buffered in+out blocks


def _rowpool_kernel(x_ref, o_ref, *, th):
    """Max over the 3 input rows of each pooling row-group.

    x_ref: (TB, BH_IN, W)  -- BH_IN >= 3*th input rows
    o_ref: (TB, BH_OUT, W) -- BH_OUT >= th output rows (row-group maxima)
    """
    r0 = x_ref[:, pl.ds(0, th, stride=K), :]   # rows 0, 3, 6, ...
    r1 = x_ref[:, pl.ds(1, th, stride=K), :]   # rows 1, 4, 7, ...
    r2 = x_ref[:, pl.ds(2, th, stride=K), :]   # rows 2, 5, 8, ...
    o_ref[:, pl.ds(0, th), :] = jnp.maximum(jnp.maximum(r0, r1), r2)


def _choose_tiles(nc, ho, h, w):
    """Pick (TB, TH, BH_IN, BH_OUT): channel-images / row-groups per grid step."""
    wpad = ((w + 127) // 128) * 128   # lane padding of the minor dim in VMEM

    def buf_bytes(tb, rows_in, rows_out):
        rin = ((rows_in + 7) // 8) * 8
        rout = ((rows_out + 7) // 8) * 8
        return 2 * (rin + rout) * wpad * 4 * tb   # double-buffered in + out

    if ho <= 8:
        # One block covers the whole H axis; use full-dim blocks (tiling rule
        # is trivially satisfied and no block ever exceeds the array bounds).
        th, bh_in, bh_out = ho, h, ho
    else:
        th, bh_in, bh_out = 8, 8 * K, 8           # 24 rows: multiple of 8 sublanes

    tb = max(1, min(nc, _VMEM_BUDGET // buf_bytes(1, bh_in, bh_out)))

    # If the channel axis alone cannot reach multi-MiB steps, take more
    # row-groups per step instead (TH stays a multiple of 8 and <= Ho).
    while (ho > 8 and tb == nc and th * 2 <= ho
           and buf_bytes(nc, th * 2 * K, th * 2) <= _VMEM_BUDGET):
        th *= 2
        bh_in, bh_out = th * K, th

    return tb, th, bh_in, bh_out


@jax.jit
def learn_maxpool_forward(x):
    """MaxPool2d(kernel_size=3, stride=3, padding=0, ceil_mode=False), NCHW."""
    n, c, h, w = x.shape
    ho = (h - K) // K + 1
    wo = (w - K) // K + 1
    nc = n * c

    x3 = x.reshape(nc, h, w)          # free reshape, no data movement
    tb, th, bh_in, bh_out = _choose_tiles(nc, ho, h, w)
    grid = (pl.cdiv(nc, tb), pl.cdiv(ho, th))

    # Stage 1 (Pallas, reads the full input once): per row-group max over the
    # 3 H-taps -> (N*C, Ho, W), lane-dense full-W tiles.
    row_max = pl.pallas_call(
        functools.partial(_rowpool_kernel, th=th),
        out_shape=jax.ShapeDtypeStruct((nc, ho, w), x.dtype),
        grid=grid,
        in_specs=[pl.BlockSpec((tb, bh_in, w), lambda b, i: (b, i, 0))],
        out_specs=pl.BlockSpec((tb, bh_out, w), lambda b, i: (b, i, 0)),
        compiler_params=pltpu.CompilerParams(
            dimension_semantics=("parallel", "parallel")),
    )(x3)

    # Stage 2: stride-3 max along W on the 3x-reduced intermediate.
    # TODO(synk): fold this into the kernel once a lane-group-of-3 compaction
    # (lane-strided load / lane-splitting reshape) lowers reliably on TPU; it
    # currently costs ~0.6x of the input size in extra HBM traffic.
    out = jax.lax.reduce_window(
        row_max, -jnp.inf, jax.lax.max,
        window_dimensions=(1, 1, K),
        window_strides=(1, 1, K),
        padding="VALID",
    )
    return out.reshape(n, c, ho, wo)


if __name__ == "__main__":
    # LearnMaxpool has no learnable parameters (MaxPool2d only).
    key = jax.random.PRNGKey(0)
    x = jax.random.normal(key, (2, 4, 16, 16), dtype=jnp.float32)  # NCHW

    y = jax.block_until_ready(learn_maxpool_forward(x))

    # Independent reference: XLA reduce_window over the full 3x3 window.
    ref = jax.lax.reduce_window(
        x, -jnp.inf, jax.lax.max,
        window_dimensions=(1, 1, K, K),
        window_strides=(1, 1, K, K),
        padding="VALID",
    )
    assert y.shape == (2, 4, 5, 5), y.shape
    assert y.dtype == x.dtype
    assert jnp.allclose(y, ref), "Pallas maxpool mismatch vs reference"

    print("KERNEL_OK")
</pallas_src>

<mosaic_0001>
module attributes {stable_mosaic.version = 11 : i64} {
  func.func @_rowpool_kernel(%arg0: i32, %arg1: i32, %arg2: memref<8x16x16xf32, #tpu.memory_space<vmem>>, %arg3: memref<8x5x16xf32, #tpu.memory_space<vmem>>) attributes {dimension_semantics = [#tpu.dimension_semantics<parallel>, #tpu.dimension_semantics<parallel>], iteration_bounds = array<i64: 1, 1>, scalar_prefetch = 0 : i64, scratch_operands = 0 : i64, tpu.core_type = #tpu.core_type<tc>, window_params = [{transform_indices = @transform_0, window_bounds = array<i64: 8, 16, 16>}, {transform_indices = @transform_1, window_bounds = array<i64: 8, 5, 16>}]} {
    %c0 = arith.constant 0 : index
    %c0_0 = arith.constant 0 : index
    %c0_1 = arith.constant 0 : index
    %0 = tpu.strided_load %arg2[%c0, %c0_0, %c0_1] {strides = array<i32: 1, 3, 1>} : memref<8x16x16xf32, #tpu.memory_space<vmem>>, vector<8x5x16xf32>
    %c0_2 = arith.constant 0 : index
    %c1 = arith.constant 1 : index
    %c0_3 = arith.constant 0 : index
    %1 = tpu.strided_load %arg2[%c0_2, %c1, %c0_3] {strides = array<i32: 1, 3, 1>} : memref<8x16x16xf32, #tpu.memory_space<vmem>>, vector<8x5x16xf32>
    %c0_4 = arith.constant 0 : index
    %c2 = arith.constant 2 : index
    %c0_5 = arith.constant 0 : index
    %2 = tpu.strided_load %arg2[%c0_4, %c2, %c0_5] {strides = array<i32: 1, 3, 1>} : memref<8x16x16xf32, #tpu.memory_space<vmem>>, vector<8x5x16xf32>
    %3 = arith.maximumf %0, %1 : vector<8x5x16xf32>
    %4 = arith.maximumf %3, %2 : vector<8x5x16xf32>
    %c0_6 = arith.constant 0 : index
    %c0_7 = arith.constant 0 : index
    %c0_8 = arith.constant 0 : index
    %5 = vector.load %arg3[%c0_6, %c0_7, %c0_8] : memref<8x5x16xf32, #tpu.memory_space<vmem>>, vector<8x5x16xf32>
    tpu.vector_store %arg3[%c0_6, %c0_7, %c0_8], %4 {strides = array<i32>} : memref<8x5x16xf32, #tpu.memory_space<vmem>>, vector<8x5x16xf32>,
    return
  }
  func.func @transform_0(%arg0: i32, %arg1: i32) -> (i32, i32, i32) {
    %c0_i32 = arith.constant 0 : i32
    %c0_i32_0 = arith.constant 0 : i32
    return %arg0, %arg1, %c0_i32 : i32, i32, i32
  }
  func.func @transform_1(%arg0: i32, %arg1: i32) -> (i32, i32, i32) {
    %c0_i32 = arith.constant 0 : i32
    %c0_i32_0 = arith.constant 0 : i32
    return %arg0, %arg1, %c0_i32 : i32, i32, i32
  }
}

</mosaic_0001>

<llo_original>
// kernel: learn_maxpool_forward.1
$region0: #{learn_maxpool_forward.1}
  #allocation0 [shape = 'u32[]', space=smem, size = 0x4, offset = 0x4, fixed_abs, tag = 'smem constant byte address 0x4 - core index']
  #allocation1 [shape = 'u32[144,128]{1,0:T(1,128)}', space=vmem, size = 0x12000, scoped, tag = 'internal scratch']
  %s0 = inlined_call_operand.hbm [shape: f32[8,16,16], index: 0, kind: input, shape index: {}]
  %s1 = inlined_call_operand.vmem [shape: f32[8,5,16], index: 1, kind: output, shape index: {}]
  %s2 = sld [smem:[#allocation0]]
  $region18: #{learn_maxpool_forward.1} parent=0
    _
  %s4 = ssub.s32 1, %s2
  %s5 = scalar_select 0, %s4, %s2
  $region1: #{learn_maxpool_forward.1} parent=0
    #allocation2 [shape = 'u8[65536]{0}', space=vmem, size = 0x10000, scoped, tag = 'input window, operand 0, single buffered']
    #allocation3 [shape = 's32[1]{0}', space=sflag, size = 0x4, scoped, tag = 'scoped memory for learn_maxpool_forward.1']
    %6 = vsyncpa [#allocation3], 0
    // Predicated region
    $region2: #{learn_maxpool_forward.1} parent=1 // pred_check
      _
    $region3: #{learn_maxpool_forward.1} parent=1 // pred_check_branch
      %8 = sbr.rel (0) target = $region5
    $region4: #{learn_maxpool_forward.1} parent=1 // pred_region
      %s10 = ssub.s32 2048, 2048
      %11 = vsyncadd [#allocation3], %s10
      %s12 = sshll.u32 [#allocation2], 4
      %s13 = int_to_ptr.vmem [resolvable:$true] %s12
      %18 = dma.hbm_to_vmem [thread:$0]  %s0, 2048, %s13, [#allocation3], 128, 128, 8
    $region5: #{learn_maxpool_forward.1} parent=1 // pred_fallthru
      _
    // Predicated region
    $region6: #{learn_maxpool_forward.1} parent=1 // pred_check
      _
    $region7: #{learn_maxpool_forward.1} parent=1 // pred_check_branch
      %20 = sbr.rel (0) target = $region9
    $region8: #{learn_maxpool_forward.1} parent=1 // pred_region
      %21 = dma.done [#allocation3], 2048
    $region9: #{learn_maxpool_forward.1} parent=1 // pred_fallthru
      _
    %v22 = vld [vmem:[#allocation2] ss:$3 sm:$0x1f]
    %s23 = scalar_lea.vmem [#allocation2], 16
    %v24 = vld [vmem:[%s23] ss:$3 sm:$0x1f]
    %s25 = scalar_lea.vmem [#allocation2], 32
    %v26 = vld [vmem:[%s25] ss:$3 sm:$0x1f]
    %s27 = scalar_lea.vmem [#allocation2], 48
    %v28 = vld [vmem:[%s27] ss:$3 sm:$0x1f]
    %s29 = scalar_lea.vmem [#allocation2], 64
    %v30 = vld [vmem:[%s29] ss:$3 sm:$0x1f]
    %s31 = scalar_lea.vmem [#allocation2], 80
    %v32 = vld [vmem:[%s31] ss:$3 sm:$0x1f]
    %s33 = scalar_lea.vmem [#allocation2], 96
    %v34 = vld [vmem:[%s33] ss:$3 sm:$0x1f]
    %s35 = scalar_lea.vmem [#allocation2], 112
    %v36 = vld [vmem:[%s35] ss:$3 sm:$0x1f]
    %s37 = scalar_lea.vmem [#allocation2], 1
    %v38 = vld [vmem:[%s37] ss:$3 sm:$0x1f]
    %s39 = scalar_lea.vmem [#allocation2], 17
    %v40 = vld [vmem:[%s39] ss:$3 sm:$0x1f]
    %s41 = scalar_lea.vmem [#allocation2], 33
    %v42 = vld [vmem:[%s41] ss:$3 sm:$0x1f]
    %s43 = scalar_lea.vmem [#allocation2], 49
    %v44 = vld [vmem:[%s43] ss:$3 sm:$0x1f]
    %s45 = scalar_lea.vmem [#allocation2], 65
    %v46 = vld [vmem:[%s45] ss:$3 sm:$0x1f]
    %s47 = scalar_lea.vmem [#allocation2], 81
    %v48 = vld [vmem:[%s47] ss:$3 sm:$0x1f]
    %s49 = scalar_lea.vmem [#allocation2], 97
    %v50 = vld [vmem:[%s49] ss:$3 sm:$0x1f]
    %s51 = scalar_lea.vmem [#allocation2], 113
    %v52 = vld [vmem:[%s51] ss:$3 sm:$0x1f]
    %s53 = scalar_lea.vmem [#allocation2], 2
    %v54 = vld [vmem:[%s53] ss:$3 sm:$0x1f]
    %s55 = scalar_lea.vmem [#allocation2], 18
    %v56 = vld [vmem:[%s55] ss:$3 sm:$0x1f]
    %s57 = scalar_lea.vmem [#allocation2], 34
    %v58 = vld [vmem:[%s57] ss:$3 sm:$0x1f]
    %s59 = scalar_lea.vmem [#allocation2], 50
    %v60 = vld [vmem:[%s59] ss:$3 sm:$0x1f]
    %s61 = scalar_lea.vmem [#allocation2], 66
    %v62 = vld [vmem:[%s61] ss:$3 sm:$0x1f]
    %s63 = scalar_lea.vmem [#allocation2], 82
    %v64 = vld [vmem:[%s63] ss:$3 sm:$0x1f]
    %s65 = scalar_lea.vmem [#allocation2], 98
    %v66 = vld [vmem:[%s65] ss:$3 sm:$0x1f]
    %s67 = scalar_lea.vmem [#allocation2], 114
    %v68 = vld [vmem:[%s67] ss:$3 sm:$0x1f]
    %v69 = vmax.f32 %v22, %v38
    %v70 = vmax.f32 %v24, %v40
    %v71 = vmax.f32 %v26, %v42
    %v72 = vmax.f32 %v28, %v44
    %v73 = vmax.f32 %v30, %v46
    %v74 = vmax.f32 %v32, %v48
    %v75 = vmax.f32 %v34, %v50
    %v76 = vmax.f32 %v36, %v52
    %v77 = vmax.f32 %v69, %v54
    %v78 = vmax.f32 %v70, %v56
    %v79 = vmax.f32 %v71, %v58
    %v80 = vmax.f32 %v72, %v60
    %v81 = vmax.f32 %v73, %v62
    %v82 = vmax.f32 %v74, %v64
    %v83 = vmax.f32 %v75, %v66
    %v84 = vmax.f32 %v76, %v68
    %vm85 = vcmask 126976
    %86 = vst.msk [vmem:[%s1] sm:$0x1f] %vm85, %v77
    %87 = vst.msk [vmem:[%s1 + $0x8] sm:$0x1f] %vm85, %v78
    %88 = vst.msk [vmem:[%s1 + $0x10] sm:$0x1f] %vm85, %v79
    %89 = vst.msk [vmem:[%s1 + $0x18] sm:$0x1f] %vm85, %v80
    %90 = vst.msk [vmem:[%s1 + $0x20] sm:$0x1f] %vm85, %v81
    %91 = vst.msk [vmem:[%s1 + $0x28] sm:$0x1f] %vm85, %v82
    %92 = vst.msk [vmem:[%s1 + $0x30] sm:$0x1f] %vm85, %v83
    %93 = vst.msk [vmem:[%s1 + $0x38] sm:$0x1f] %vm85, %v84
    // Predicated region
    $region10: #{learn_maxpool_forward.1} parent=1 // pred_check
      _
    $region11: #{learn_maxpool_forward.1} parent=1 // pred_check_branch
      %95 = sbr.rel (0) target = $region13
    $region12: #{learn_maxpool_forward.1} parent=1 // pred_region
      _
    $region13: #{learn_maxpool_forward.1} parent=1 // pred_fallthru
      _
    // Predicated region
    $region14: #{learn_maxpool_forward.1} parent=1 // pred_check
      _
    $region15: #{learn_maxpool_forward.1} parent=1 // pred_check_branch
      %97 = sbr.rel (0) target = $region17
    $region16: #{learn_maxpool_forward.1} parent=1 // pred_region
      _
    $region17: #{learn_maxpool_forward.1} parent=1 // pred_fallthru
      _
    %98 = vsyncpa [#allocation3], 1

</llo_original>
